<compile_context>
chip_gen: v7x
topology: tpu7x:2x2x1
jax: 0.10.0
libtpu: 0.0.40
codegen_flags: <defaults>
</compile_context>

<pallas_src>
import functools

import jax
import jax.numpy as jnp
from jax import lax
from jax.experimental import pallas as pl
from jax.experimental.pallas import tpu as pltpu


def _cdiv(a, b):
    return -(-a // b)


def _round_up(x, m):
    return _cdiv(x, m) * m


def _recon_loss_kernel(xsrc_ref, xmid_ref, w_ref, b_ref, out_ref, *,
                       hw_total, hw_tile, chunk, n_chunks,
                       full_tiles, needs_mask):
    si = pl.program_id(1)
    ti = pl.program_id(2)
    g = si * pl.num_programs(2) + ti          # global (unclamped) spatial tile

    @pl.when(ti == 0)
    def _():
        out_ref[...] = jnp.zeros_like(out_ref)

    w = w_ref[...]                            # (Cs, Cm) f32 (cast in wrapper)
    bias = b_ref[...]                         # (Cs, 1)  f32

    def accumulate(masked):
        # Statically unrolled chunk loop: offsets are compile-time constants
        # (128-aligned), temporaries stay (C, chunk)-sized.
        for c in range(n_chunks):
            off = c * chunk
            xs = xsrc_ref[0, :, off:off + chunk].astype(jnp.float32)
            xm = xmid_ref[0, :, off:off + chunk].astype(jnp.float32)
            # decoder: 1x1 conv over channels == (Cs,Cm) @ (Cm,chunk) on MXU.
            dec = jnp.dot(w, xm, preferred_element_type=jnp.float32) + bias
            diff = xs - dec                                   # (Cs, chunk)
            # Per-pixel squared channel norm: sublane reduce, lanes dense.
            s = jnp.sum(diff * diff, axis=0, keepdims=True)   # (1, chunk)
            # sum_c(F.normalize(diff)_c^2) == s / max(s, 1e-24)
            contrib = jnp.where(s >= jnp.float32(1e-24),
                                jnp.float32(1.0), s * jnp.float32(1e24))
            if masked:
                pix = (g * hw_tile + off
                       + lax.broadcasted_iota(jnp.int32, (1, chunk), 1))
                contrib = jnp.where(pix < hw_total, contrib, jnp.float32(0.0))
            out_ref[0, :, off:off + chunk] += contrib

    if not needs_mask:
        accumulate(False)
    else:
        edge = g >= full_tiles                # partial or duplicated edge tile

        @pl.when(jnp.logical_not(edge))
        def _():
            accumulate(False)

        @pl.when(edge)
        def _():
            accumulate(True)


def reconstruction_loss(x_src, x_mid, w, b):
    """x_src: (B, C_src, H, W); x_mid: (B, C_mid, H, W) (NCHW).
    w: (C_src, C_mid) 1x1-conv weight; b: (C_src,) bias."""
    B, Cs, H, W = x_src.shape
    Bm, Cm, Hm, Wm = x_mid.shape
    assert (B, H, W) == (Bm, Hm, Wm)
    HW = H * W

    # NCHW -> (B, C, H*W): pure reshape of contiguous memory (no transpose).
    xs = x_src.reshape(B, Cs, HW)
    xm = x_mid.reshape(B, Cm, HW)
    # Cast loop-invariant decoder params once (stay resident in VMEM).
    w2 = jnp.asarray(w, jnp.float32).reshape(Cs, Cm)
    b2 = jnp.asarray(b, jnp.float32).reshape(Cs, 1)

    in_db = max(x_src.dtype.itemsize, x_mid.dtype.itemsize)
    hw_pad = _round_up(HW, 128)

    # --- tile sizing from byte budgets (review items 1-3) -------------------
    DMA_BUDGET = 4 * 1024 * 1024      # per-step input DMA target
    INTER_BUDGET = 4 * 1024 * 1024    # per-chunk f32 temporaries budget

    # DMA-driven tile: (Cs+Cm)*hw_tile*in_db ~ DMA_BUDGET
    hw_tile = max(128, (DMA_BUDGET // ((Cs + Cm) * in_db)) // 128 * 128)
    # Cap so the spatial axis can also be split across 2 TCs (v7x megacore).
    n_split = 2
    hw_tile = min(hw_tile, _round_up(_cdiv(hw_pad, n_split), 128), hw_pad)

    # Chunk cap from f32 intermediates (~(3*Cs+Cm)*chunk*4 bytes).
    chunk_cap = max(128, (INTER_BUDGET // ((3 * Cs + Cm) * 4)) // 128 * 128)
    n_chunks = _cdiv(hw_tile, chunk_cap)
    chunk = _round_up(hw_tile // n_chunks, 128)
    hw_tile = n_chunks * chunk                 # hw_tile is a multiple of chunk

    T_des = _cdiv(HW, hw_tile)                 # real spatial tiles
    if T_des < n_split:
        n_split = 1                            # too small to split usefully
    num_t = _cdiv(T_des, n_split)
    T_grid = n_split * num_t                   # tiles covered by the grid
    full_tiles = HW // hw_tile                 # tiles fully inside [0, HW)
    needs_mask = T_grid > full_tiles

    # --- VMEM budget (double-buffered inputs + resident out + temporaries) --
    vmem_est = (2 * (Cs + Cm) * hw_tile * in_db
                + 2 * hw_tile * 4
                + (3 * Cs + Cm) * chunk * 4
                + 2 * (Cs * Cm + Cs) * 4)
    vmem_limit = int(min(48 * 1024 * 1024,
                         max(32 * 1024 * 1024, 2 * vmem_est)))

    def x_map(bi, si, ti):
        # Clamp so edge/duplicated tiles always issue an in-bounds DMA start;
        # their contributions are zeroed by the in-kernel mask.
        return (bi, 0, jnp.minimum(si * num_t + ti, T_des - 1))

    cost = pl.CostEstimate(
        flops=int(2 * B * Cs * Cm * HW + 6 * B * Cs * HW),
        transcendentals=0,
        bytes_accessed=int(B * HW * (Cs + Cm) * in_db
                           + (Cs * Cm + Cs) * 4
                           + B * n_split * hw_tile * 4),
    )

    partials = pl.pallas_call(
        functools.partial(_recon_loss_kernel, hw_total=HW, hw_tile=hw_tile,
                          chunk=chunk, n_chunks=n_chunks,
                          full_tiles=full_tiles, needs_mask=needs_mask),
        out_shape=jax.ShapeDtypeStruct((B * n_split, 1, hw_tile), jnp.float32),
        grid_spec=pltpu.PrefetchScalarGridSpec(
            num_scalar_prefetch=0,
            grid=(B, n_split, num_t),
            in_specs=[
                pl.BlockSpec((1, Cs, hw_tile), x_map),
                pl.BlockSpec((1, Cm, hw_tile), x_map),
                pl.BlockSpec((Cs, Cm), lambda bi, si, ti: (0, 0)),
                pl.BlockSpec((Cs, 1), lambda bi, si, ti: (0, 0)),
            ],
            # Resident lane-dense accumulator per (batch, split); revisited
            # only along the trailing "arbitrary" spatial axis.
            out_specs=pl.BlockSpec(
                (1, 1, hw_tile),
                lambda bi, si, ti: (bi * n_split + si, 0, 0)),
        ),
        compiler_params=pltpu.CompilerParams(
            dimension_semantics=("parallel", "parallel", "arbitrary"),
            vmem_limit_bytes=vmem_limit,
        ),
        cost_estimate=cost,
    )(xs, xm, w2, b2)

    total_elems = B * Cs * H * W               # numel of x_reconstruct
    return jnp.sum(partials) / (total_elems * 1000.0)


def _reference_loss(x_src, x_mid, w, b):
    """Pure-JAX reference mirroring the PyTorch forward (NCHW)."""
    dec = jnp.einsum('oc,bchw->bohw', w, x_mid) + b[None, :, None, None]
    diff = x_src - dec
    norm = jnp.maximum(
        jnp.sqrt(jnp.sum(diff * diff, axis=1, keepdims=True)), 1e-12)
    r = diff / norm
    return jnp.mean(r * r) / 1000.0


if __name__ == "__main__":
    key = jax.random.PRNGKey(0)
    k1, k2, k3, k4 = jax.random.split(key, 4)

    B, Cs, Cm, H, W = 2, 4, 8, 16, 16          # small shapes; H*W = 256
    x_src = jax.random.normal(k1, (B, Cs, H, W), dtype=jnp.float32)
    x_mid = jax.random.normal(k2, (B, Cm, H, W), dtype=jnp.float32)

    # deterministic synthetic decoder params (1x1 conv): W (Cs, Cm), b (Cs,)
    w = 0.1 * jax.random.normal(k3, (Cs, Cm), dtype=jnp.float32)
    b = 0.1 * jax.random.normal(k4, (Cs,), dtype=jnp.float32)

    loss = jax.block_until_ready(reconstruction_loss(x_src, x_mid, w, b))
    ref = jax.block_until_ready(_reference_loss(x_src, x_mid, w, b))
    assert jnp.allclose(loss, ref, rtol=1e-4, atol=1e-8), (loss, ref)

    print("KERNEL_OK")
</pallas_src>

<mosaic_0001>
module attributes {stable_mosaic.version = 11 : i64} {
  func.func @_recon_loss_kernel(%arg0: i32, %arg1: i32, %arg2: i32, %arg3: memref<1x4x128xf32, #tpu.memory_space<vmem>>, %arg4: memref<1x8x128xf32, #tpu.memory_space<vmem>>, %arg5: memref<4x8xf32, #tpu.memory_space<vmem>>, %arg6: memref<4x1xf32, #tpu.memory_space<vmem>>, %arg7: memref<1x1x128xf32, #tpu.memory_space<vmem>>) attributes {dimension_semantics = [#tpu.dimension_semantics<parallel>, #tpu.dimension_semantics<parallel>, #tpu.dimension_semantics<arbitrary>], iteration_bounds = array<i64: 2, 2, 1>, scalar_prefetch = 0 : i64, scratch_operands = 0 : i64, tpu.core_type = #tpu.core_type<tc>, window_params = [{transform_indices = @transform_0, window_bounds = array<i64: 1, 4, 128>}, {transform_indices = @transform_1, window_bounds = array<i64: 1, 8, 128>}, {pipeline_mode = #tpu.pipeline_mode<synchronous>, transform_indices = @transform_2, window_bounds = array<i64: 4, 8>}, {pipeline_mode = #tpu.pipeline_mode<synchronous>, transform_indices = @transform_3, window_bounds = array<i64: 4, 1>}, {transform_indices = @transform_4, window_bounds = array<i64: 1, 1, 128>}]} {
    %c0_i32 = arith.constant 0 : i32
    %0 = arith.cmpi eq, %arg2, %c0_i32 : i32
    %1 = arith.extui %0 : i1 to i32
    %c0_i32_0 = arith.constant 0 : i32
    %2 = arith.cmpi ne, %1, %c0_i32_0 : i32
    scf.if %2 {
      %cst_20 = arith.constant 0.000000e+00 : f32
      %28 = vector.broadcast %cst_20 : f32 to vector<1x1x128xf32>
      %c0_21 = arith.constant 0 : index
      %c0_22 = arith.constant 0 : index
      %c0_23 = arith.constant 0 : index
      %29 = vector.load %arg7[%c0_21, %c0_22, %c0_23] : memref<1x1x128xf32, #tpu.memory_space<vmem>>, vector<1x1x128xf32>
      tpu.vector_store %arg7[%c0_21, %c0_22, %c0_23], %28 {strides = array<i32>} : memref<1x1x128xf32, #tpu.memory_space<vmem>>, vector<1x1x128xf32>,
    } else {
    }
    %c0 = arith.constant 0 : index
    %c0_1 = arith.constant 0 : index
    %3 = vector.load %arg5[%c0, %c0_1] : memref<4x8xf32, #tpu.memory_space<vmem>>, vector<4x8xf32>
    %c0_2 = arith.constant 0 : index
    %c0_3 = arith.constant 0 : index
    %4 = vector.load %arg6[%c0_2, %c0_3] : memref<4x1xf32, #tpu.memory_space<vmem>>, vector<4x1xf32>
    %c0_4 = arith.constant 0 : index
    %c0_5 = arith.constant 0 : index
    %c0_6 = arith.constant 0 : index
    %5 = vector.load %arg3[%c0_4, %c0_5, %c0_6] : memref<1x4x128xf32, #tpu.memory_space<vmem>>, vector<1x4x128xf32>
    %6 = vector.shape_cast %5 : vector<1x4x128xf32> to vector<4x128xf32>
    %c0_7 = arith.constant 0 : index
    %c0_8 = arith.constant 0 : index
    %c0_9 = arith.constant 0 : index
    %7 = vector.load %arg4[%c0_7, %c0_8, %c0_9] : memref<1x8x128xf32, #tpu.memory_space<vmem>>, vector<1x8x128xf32>
    %8 = vector.shape_cast %7 : vector<1x8x128xf32> to vector<8x128xf32>
    %cst = arith.constant dense<0.000000e+00> : vector<4x128xf32>
    %9 = tpu.matmul %3, %8, %cst {dimension_numbers = #tpu.dot_dimension_numbers<[1], [0], [0], [1], [0, 0, 1, 1], [], []>} : vector<4x8xf32>, vector<8x128xf32>, vector<4x128xf32> -> vector<4x128xf32>
    %10 = vector.broadcast %4 : vector<4x1xf32> to vector<4x128xf32>
    %11 = arith.addf %9, %10 : vector<4x128xf32>
    %12 = arith.subf %6, %11 : vector<4x128xf32>
    %13 = arith.mulf %12, %12 : vector<4x128xf32>
    %cst_10 = arith.constant dense<0.000000e+00> : vector<128xf32>
    %14 = vector.multi_reduction <add>, %13, %cst_10 [0] : vector<4x128xf32> to vector<128xf32>
    %15 = vector.shape_cast %14 : vector<128xf32> to vector<1x128xf32>
    %cst_11 = arith.constant 1.000000e-24 : f32
    %16 = vector.broadcast %cst_11 : f32 to vector<1x128xf32>
    %17 = arith.cmpf oge, %15, %16 : vector<1x128xf32>
    %cst_12 = arith.constant 1.000000e+24 : f32
    %18 = vector.broadcast %cst_12 : f32 to vector<1x128xf32>
    %19 = arith.mulf %15, %18 : vector<1x128xf32>
    %cst_13 = arith.constant 1.000000e+00 : f32
    %20 = vector.broadcast %cst_13 : f32 to vector<1x128xf32>
    %21 = arith.select %17, %20, %19 : vector<1x128xi1>, vector<1x128xf32>
    %c0_14 = arith.constant 0 : index
    %c0_15 = arith.constant 0 : index
    %c0_16 = arith.constant 0 : index
    %22 = vector.load %arg7[%c0_14, %c0_15, %c0_16] : memref<1x1x128xf32, #tpu.memory_space<vmem>>, vector<1x1x128xf32>
    %23 = vector.shape_cast %22 : vector<1x1x128xf32> to vector<1x128xf32>
    %24 = arith.addf %23, %21 : vector<1x128xf32>
    %c0_17 = arith.constant 0 : index
    %c0_18 = arith.constant 0 : index
    %c0_19 = arith.constant 0 : index
    %25 = vector.load %arg7[%c0_17, %c0_18, %c0_19] : memref<1x1x128xf32, #tpu.memory_space<vmem>>, vector<1x1x128xf32>
    %26 = vector.shape_cast %25 : vector<1x1x128xf32> to vector<1x128xf32>
    %27 = vector.shape_cast %24 : vector<1x128xf32> to vector<1x1x128xf32>
    tpu.vector_store %arg7[%c0_17, %c0_18, %c0_19], %27 {strides = array<i32>} : memref<1x1x128xf32, #tpu.memory_space<vmem>>, vector<1x1x128xf32>,
    return
  }
  func.func @transform_0(%arg0: i32, %arg1: i32, %arg2: i32) -> (i32, i32, i32) {
    %c1_i32 = arith.constant 1 : i32
    %0 = arith.muli %arg1, %c1_i32 : i32
    %1 = arith.addi %0, %arg2 : i32
    %c1_i32_0 = arith.constant 1 : i32
    %2 = arith.minsi %1, %c1_i32_0 : i32
    %c0_i32 = arith.constant 0 : i32
    %c0_i32_1 = arith.constant 0 : i32
    return %arg0, %c0_i32, %2 : i32, i32, i32
  }
  func.func @transform_1(%arg0: i32, %arg1: i32, %arg2: i32) -> (i32, i32, i32) {
    %c1_i32 = arith.constant 1 : i32
    %0 = arith.muli %arg1, %c1_i32 : i32
    %1 = arith.addi %0, %arg2 : i32
    %c1_i32_0 = arith.constant 1 : i32
    %2 = arith.minsi %1, %c1_i32_0 : i32
    %c0_i32 = arith.constant 0 : i32
    %c0_i32_1 = arith.constant 0 : i32
    return %arg0, %c0_i32, %2 : i32, i32, i32
  }
  func.func @transform_2(%arg0: i32, %arg1: i32, %arg2: i32) -> (i32, i32) {
    %c0_i32 = arith.constant 0 : i32
    %c0_i32_0 = arith.constant 0 : i32
    %c0_i32_1 = arith.constant 0 : i32
    return %c0_i32, %c0_i32_0 : i32, i32
  }
  func.func @transform_3(%arg0: i32, %arg1: i32, %arg2: i32) -> (i32, i32) {
    %c0_i32 = arith.constant 0 : i32
    %c0_i32_0 = arith.constant 0 : i32
    %c0_i32_1 = arith.constant 0 : i32
    return %c0_i32, %c0_i32_0 : i32, i32
  }
  func.func @transform_4(%arg0: i32, %arg1: i32, %arg2: i32) -> (i32, i32, i32) {
    %c2_i32 = arith.constant 2 : i32
    %0 = arith.muli %arg0, %c2_i32 : i32
    %1 = arith.addi %0, %arg1 : i32
    %c0_i32 = arith.constant 0 : i32
    %c0_i32_0 = arith.constant 0 : i32
    %c0_i32_1 = arith.constant 0 : i32
    return %1, %c0_i32, %c0_i32_0 : i32, i32, i32
  }
}

</mosaic_0001>

<llo_original>
// kernel: tpu_custom_call.1
$region0: #{tpu_custom_call.1}
  #allocation0 [shape = 'u32[]', space=smem, size = 0x4, offset = 0x4, fixed_abs, tag = 'smem constant byte address 0x4 - core index']
  #allocation1 [shape = 'u32[144,128]{1,0:T(1,128)}', space=vmem, size = 0x12000, scoped, tag = 'internal scratch']
  %s0 = inlined_call_operand.hbm [shape: f32[2,4,256], index: 0, kind: input, shape index: {}]
  %s1 = inlined_call_operand.hbm [shape: f32[2,8,256], index: 1, kind: input, shape index: {}]
  %s2 = inlined_call_operand.vmem [shape: f32[4,8], index: 2, kind: input, shape index: {}]
  %s3 = inlined_call_operand.vmem [shape: f32[4,1], index: 3, kind: input, shape index: {}]
  %s4 = inlined_call_operand.hbm [shape: f32[4,1,128], index: 4, kind: output, shape index: {}]
  %s5 = sld [smem:[#allocation0]]
  $region61: #{tpu_custom_call.1} parent=0
    _
  %s7 = ssub.s32 1, %s5
  %s8 = scalar_select 0, %s7, %s5
  $region1: #{tpu_custom_call.1} parent=0
    #allocation2 [shape = 'u8[4096]{0}', space=vmem, size = 0x1000, scoped, tag = 'input window, operand 0']
    #allocation3 [shape = 's32[2]{0}', space=sflag, size = 0x8, scoped, tag = 'scoped memory for tpu_custom_call.1']
    #allocation4 [shape = 's32[2]{0}', space=sflag, size = 0x8, scoped, tag = 'scoped memory for tpu_custom_call.1']
    #allocation5 [shape = 'u8[8192]{0}', space=vmem, size = 0x2000, scoped, tag = 'input window, operand 1']
    #allocation6 [shape = 's32[2]{0}', space=sflag, size = 0x8, scoped, tag = 'scoped memory for tpu_custom_call.1']
    #allocation7 [shape = 'u8[1024]{0}', space=vmem, size = 0x400, scoped, tag = 'output window, operand 0']
    %9 = vsyncpa [#allocation3], 0
    %s10 = scalar_lea.sflag [#allocation3], 1
    %11 = vsyncpa %s10, 0
    %12 = vsyncpa [#allocation6], 0
    %s13 = scalar_lea.sflag [#allocation6], 1
    %14 = vsyncpa %s13, 0
    %15 = vsyncpa [#allocation4], 0
    %s16 = scalar_lea.sflag [#allocation4], 1
    %17 = vsyncpa %s16, 0
    loop: start=0, step=1, limit=6
    $region2: #{tpu_custom_call.1} parent=1 // loop_pre_header
      _
    $region3: #{tpu_custom_call.1} parent=1 // loop_header
      %s19 = sphi 0, %s23
      %p20 = scmp.ge.s32.totalorder %s19, 6
      %s26 = sphi 0, %s45
      %s27 = sphi 0, %s41
      %s28 = sphi 0, %s37
      %s29 = sphi 0, %s26
      %s30 = sphi 0, %s27
      %s31 = sphi 0, %s28
      %s32 = sphi 0, %s29
      %s33 = sphi 0, %s30
      %s34 = sphi 0, %s31
      %s56 = sphi 0, %s58
      %s59 = sphi 0, %s56
      %s60 = sphi 0, %s59
      %s76 = sphi 0, %s60
      %s90 = sphi 0, %s92
      %s93 = sphi 0, %s90
      %s94 = sphi 0, %s93
      %s110 = sphi 0, %s94
      %s114 = sphi 0, %s114
      %s116 = sphi 0, %s114
      %s117 = sphi 0, %s116
      %s131 = sphi 0, %s117
      %s135 = sphi 0, %s135
      %s137 = sphi 0, %s135
      %s138 = sphi 0, %s137
      %s152 = sphi 0, %s138
      %s162 = sphi 0, %s164
      %s165 = sphi 0, %s162
      %s166 = sphi 0, %s165
      %s182 = sphi 0, %s166
    $region4: #{tpu_custom_call.1} parent=1 // loop_header_branch
      %22 = sbr.rel (%p20) target = $region8
    $region5: #{tpu_custom_call.1} parent=1 // loop_body
      %s24 = ssub.s32 %s19, 1
      %s25 = ssub.s32 %s19, 2
      %s35 = sadd.s32 1, %s28
      %p36 = scmp.ge.s32.totalorder %s35, 1
      %s37 = scalar_select %p36, 0, %s35
      %s38 = sadd.s32 1, %s27
      %s39 = scalar_select %p36, %s38, %s27
      %p40 = scmp.ge.s32.totalorder %s39, 2
      %s41 = scalar_select %p40, 0, %s39
      %s42 = sadd.s32 1, %s26
      %s43 = scalar_select %p40, %s42, %s26
      %p44 = scmp.ge.s32.totalorder %s43, 2
      %s45 = scalar_select %p44, 0, %s43
      %s46 = sadd.s32 %s27, %s28
      %p47 = scmp.lt.s32.totalorder %s46, 1
      %s48 = scalar_select %p47, %s46, 1
      %s49 = sadd.s32 %s41, %s37
      %p50 = scmp.lt.s32.totalorder %s49, 1
      %s51 = scalar_select %p50, %s49, 1
      %s52 = ssub.s32 %s26, %s45
      %s53 = ssub.s32 %s48, %s51
      %s54 = sor.u32 %s52, %s53
      %p55 = scmp.eq.s32.totalorder %s54, 0
      %s57 = sadd.s32 %s56, 1
      %s58 = scalar_select %p55, %s56, %s57
      %p61 = pneg %p55
      %p62 = scmp.eq.s32.totalorder %s19, 3
      %p63 = por %p61, %p62
      %p64 = scmp.ne.s32.totalorder %s56, %s59
      %p65 = scmp.eq.s32.totalorder %s19, 0
      %p66 = por %p64, %p65
      %p67 = scmp.ne.s32.totalorder %s56, %s59
      %p68 = scmp.eq.s32.totalorder %s24, 3
      %p69 = por %p67, %p68
      %p70 = scmp.ne.s32.totalorder %s59, %s60
      %p71 = scmp.eq.s32.totalorder %s24, 0
      %p72 = por %p70, %p71
      %p73 = scmp.ne.s32.totalorder %s59, %s60
      %p74 = scmp.eq.s32.totalorder %s25, 3
      %p75 = por %p73, %p74
      %p77 = scmp.ne.s32.totalorder %s60, %s76
      %p78 = scmp.eq.s32.totalorder %s25, 0
      %p79 = por %p77, %p78
      %s80 = sadd.s32 %s27, %s28
      %p81 = scmp.lt.s32.totalorder %s80, 1
      %s82 = scalar_select %p81, %s80, 1
      %s83 = sadd.s32 %s41, %s37
      %p84 = scmp.lt.s32.totalorder %s83, 1
      %s85 = scalar_select %p84, %s83, 1
      %s86 = ssub.s32 %s26, %s45
      %s87 = ssub.s32 %s82, %s85
      %s88 = sor.u32 %s86, %s87
      %p89 = scmp.eq.s32.totalorder %s88, 0
      %s91 = sadd.s32 %s90, 1
      %s92 = scalar_select %p89, %s90, %s91
      %p95 = pneg %p89
      %p96 = scmp.eq.s32.totalorder %s19, 3
      %p97 = por %p95, %p96
      %p98 = scmp.ne.s32.totalorder %s90, %s93
      %p99 = scmp.eq.s32.totalorder %s19, 0
      %p100 = por %p98, %p99
      %p101 = scmp.ne.s32.totalorder %s90, %s93
      %p102 = scmp.eq.s32.totalorder %s24, 3
      %p103 = por %p101, %p102
      %p104 = scmp.ne.s32.totalorder %s93, %s94
      %p105 = scmp.eq.s32.totalorder %s24, 0
      %p106 = por %p104, %p105
      %p107 = scmp.ne.s32.totalorder %s93, %s94
      %p108 = scmp.eq.s32.totalorder %s25, 3
      %p109 = por %p107, %p108
      %p111 = scmp.ne.s32.totalorder %s94, %s110
      %p112 = scmp.eq.s32.totalorder %s25, 0
      %p113 = por %p111, %p112
      %s115 = sadd.s32 %s114, 1
      %p118 = scmp.eq.s32.totalorder %s19, 3
      %p119 = scmp.ne.s32.totalorder %s114, %s116
      %p120 = scmp.eq.s32.totalorder %s19, 0
      %p121 = por %p119, %p120
      %p122 = scmp.ne.s32.totalorder %s114, %s116
      %p123 = scmp.eq.s32.totalorder %s24, 3
      %p124 = por %p122, %p123
      %p125 = scmp.ne.s32.totalorder %s116, %s117
      %p126 = scmp.eq.s32.totalorder %s24, 0
      %p127 = por %p125, %p126
      %p128 = scmp.ne.s32.totalorder %s116, %s117
      %p129 = scmp.eq.s32.totalorder %s25, 3
      %p130 = por %p128, %p129
      %p132 = scmp.ne.s32.totalorder %s117, %s131
      %p133 = scmp.eq.s32.totalorder %s25, 0
      %p134 = por %p132, %p133
      %s136 = sadd.s32 %s135, 1
      %p139 = scmp.eq.s32.totalorder %s19, 3
      %p140 = scmp.ne.s32.totalorder %s135, %s137
      %p141 = scmp.eq.s32.totalorder %s19, 0
      %p142 = por %p140, %p141
      %p143 = scmp.ne.s32.totalorder %s135, %s137
      %p144 = scmp.eq.s32.totalorder %s24, 3
      %p145 = por %p143, %p144
      %p146 = scmp.ne.s32.totalorder %s137, %s138
      %p147 = scmp.eq.s32.totalorder %s24, 0
      %p148 = por %p146, %p147
      %p149 = scmp.ne.s32.totalorder %s137, %s138
      %p150 = scmp.eq.s32.totalorder %s25, 3
      %p151 = por %p149, %p150
      %p153 = scmp.ne.s32.totalorder %s138, %s152
      %p154 = scmp.eq.s32.totalorder %s25, 0
      %p155 = por %p153, %p154
      %s156 = smul.u32 %s26, 2
      %s157 = sadd.s32 %s156, %s27
      %s158 = smul.u32 %s45, 2
      %s159 = sadd.s32 %s158, %s41
      %s160 = ssub.s32 %s157, %s159
      %p161 = scmp.eq.s32.totalorder %s160, 0
      %s163 = sadd.s32 %s162, 1
      %s164 = scalar_select %p161, %s162, %s163
      %p167 = pneg %p161
      %p168 = scmp.eq.s32.totalorder %s19, 3
      %p169 = por %p167, %p168
      %p170 = scmp.ne.s32.totalorder %s162, %s165
      %p171 = scmp.eq.s32.totalorder %s19, 0
      %p172 = por %p170, %p171
      %p173 = scmp.ne.s32.totalorder %s162, %s165
      %p174 = scmp.eq.s32.totalorder %s24, 3
      %p175 = por %p173, %p174
      %p176 = scmp.ne.s32.totalorder %s165, %s166
      %p177 = scmp.eq.s32.totalorder %s24, 0
      %p178 = por %p176, %p177
      %p179 = scmp.ne.s32.totalorder %s165, %s166
      %p180 = scmp.eq.s32.totalorder %s25, 3
      %p181 = por %p179, %p180
      %p183 = scmp.ne.s32.totalorder %s166, %s182
      %p184 = scmp.eq.s32.totalorder %s25, 0
      %p185 = por %p183, %p184
      %p186 = scmp.le.s32.totalorder 1, %s19
      %p187 = scmp.lt.s32.totalorder %s19, 5
      %p188 = pnand %p186, %p187
      %p189 = pneg %p188
      // Predicated region
      $region9: #{tpu_custom_call.1} parent=5 // pred_check
        _
      $region10: #{tpu_custom_call.1} parent=5 // pred_check_branch
        %191 = sbr.rel (%p188) target = $region12
      $region11: #{tpu_custom_call.1} parent=5 // pred_region
        %s192 = ssub.s32 %s19, 1
        // Predicated region
        $region13: #{tpu_custom_call.1} parent=11 // pred_check
          %p193 = pneg %p127
        $region14: #{tpu_custom_call.1} parent=11 // pred_check_branch
          %195 = sbr.rel (%p193) target = $region16
        $region15: #{tpu_custom_call.1} parent=11 // pred_region
          _
        $region16: #{tpu_custom_call.1} parent=11 // pred_fallthru
          _
        // Predicated region
        $region17: #{tpu_custom_call.1} parent=11 // pred_check
          %p196 = pneg %p148
        $region18: #{tpu_custom_call.1} parent=11 // pred_check_branch
          %198 = sbr.rel (%p196) target = $region20
        $region19: #{tpu_custom_call.1} parent=11 // pred_region
          _
        $region20: #{tpu_custom_call.1} parent=11 // pred_fallthru
          _
      $region12: #{tpu_custom_call.1} parent=5 // pred_fallthru
        _
      %p199 = scmp.lt.s32.totalorder %s19, 4
      // Predicated region
      $region21: #{tpu_custom_call.1} parent=5 // pred_check
        %p200 = pneg %p199
      $region22: #{tpu_custom_call.1} parent=5 // pred_check_branch
        %202 = sbr.rel (%p200) target = $region24
      $region23: #{tpu_custom_call.1} parent=5 // pred_region
        // Predicated region
        $region25: #{tpu_custom_call.1} parent=23 // pred_check
          %p203 = pneg %p66
        $region26: #{tpu_custom_call.1} parent=23 // pred_check_branch
          %205 = sbr.rel (%p203) target = $region28
        $region27: #{tpu_custom_call.1} parent=23 // pred_region
          %s206 = sand.u32 %s56, 1
          %s207 = scalar_lea.sflag [#allocation3], %s206
          %s208 = sand.u32 %s56, 1
          %s209 = smul.addr %s208, 4
          %s210 = scalar_lea.vmem [#allocation2], %s209
          %s211 = sadd.s32 %s27, %s28
          %p212 = scmp.lt.s32.totalorder %s211, 1
          %s213 = scalar_select %p212, %s211, 1
          %s215 = ssub.s32 64, 64
          %216 = vsyncadd %s207, %s215
          %s217 = smul.addr %s26, 2
          %s218 = sadd.s32 %s213, %s217
          %s219 = smul.addr %s218, 64
          %s220 = scalar_lea.hbm %s0, %s219
          %s222 = sshll.u32 %s210, 4
          %s223 = int_to_ptr.vmem [resolvable:$true] %s222
          %225 = dma.hbm_to_vmem [thread:$0]  %s220, 64, %s223, %s207
        $region28: #{tpu_custom_call.1} parent=23 // pred_fallthru
          _
        // Predicated region
        $region29: #{tpu_custom_call.1} parent=23 // pred_check
          %p226 = pneg %p100
        $region30: #{tpu_custom_call.1} parent=23 // pred_check_branch
          %228 = sbr.rel (%p226) target = $region32
        $region31: #{tpu_custom_call.1} parent=23 // pred_region
          %s229 = sand.u32 %s90, 1
          %s230 = scalar_lea.sflag [#allocation6], %s229
          %s231 = sand.u32 %s90, 1
          %s232 = smul.addr %s231, 8
          %s233 = scalar_lea.vmem [#allocation5], %s232
          %s234 = sadd.s32 %s27, %s28
          %p235 = scmp.lt.s32.totalorder %s234, 1
          %s236 = scalar_select %p235, %s234, 1
          %s238 = ssub.s32 128, 128
          %239 = vsyncadd %s230, %s238
          %s240 = smul.addr %s26, 2
          %s241 = sadd.s32 %s236, %s240
          %s242 = smul.addr %s241, 128
          %s243 = scalar_lea.hbm %s1, %s242
          %s245 = sshll.u32 %s233, 4
          %s246 = int_to_ptr.vmem [resolvable:$true] %s245
          %248 = dma.hbm_to_vmem [thread:$0]  %s243, 128, %s246, %s230
        $region32: #{tpu_custom_call.1} parent=23 // pred_fallthru
          _
      $region24: #{tpu_custom_call.1} parent=5 // pred_fallthru
        _
      %p249 = scmp.le.s32.totalorder 1, %s19
      %p250 = scmp.lt.s32.totalorder %s19, 5
      %p251 = pnand %p249, %p250
      %p252 = pneg %p251
      // Predicated region
      $region33: #{tpu_custom_call.1} parent=5 // pred_check
        _
      $region34: #{tpu_custom_call.1} parent=5 // pred_check_branch
        %254 = sbr.rel (%p251) target = $region36
      $region35: #{tpu_custom_call.1} parent=5 // pred_region
        %s255 = ssub.s32 %s19, 1
        %s256 = sand.u32 %s59, 1
        %s257 = scalar_lea.sflag [#allocation3], %s256
        %s258 = sand.u32 %s59, 1
        %s259 = smul.addr %s258, 4
        %s260 = scalar_lea.vmem [#allocation2], %s259
        // Predicated region
        $region37: #{tpu_custom_call.1} parent=35 // pred_check
          %p261 = pneg %p72
        $region38: #{tpu_custom_call.1} parent=35 // pred_check_branch
          %263 = sbr.rel (%p261) target = $region40
        $region39: #{tpu_custom_call.1} parent=35 // pred_region
          %264 = dma.done %s257, 64
        $region40: #{tpu_custom_call.1} parent=35 // pred_fallthru
          _
        %s265 = sand.u32 %s93, 1
        %s266 = scalar_lea.sflag [#allocation6], %s265
        %s267 = sand.u32 %s93, 1
        %s268 = smul.addr %s267, 8
        %s269 = scalar_lea.vmem [#allocation5], %s268
        // Predicated region
        $region41: #{tpu_custom_call.1} parent=35 // pred_check
          %p270 = pneg %p106
        $region42: #{tpu_custom_call.1} parent=35 // pred_check_branch
          %272 = sbr.rel (%p270) target = $region44
        $region43: #{tpu_custom_call.1} parent=35 // pred_region
          %273 = dma.done %s266, 128
        $region44: #{tpu_custom_call.1} parent=35 // pred_fallthru
          _
        %s274 = sand.u32 %s59, 1
        %s275 = scalar_lea.sflag [#allocation3], %s274
        %s276 = sand.u32 %s59, 1
        %s277 = smul.addr %s276, 4
        %s278 = scalar_lea.vmem [#allocation2], %s277
        %p279 = pneg %p72
        %p280 = pneg %p69
        %s281 = sand.u32 %s93, 1
        %s282 = scalar_lea.sflag [#allocation6], %s281
        %s283 = sand.u32 %s93, 1
        %s284 = smul.addr %s283, 8
        %s285 = scalar_lea.vmem [#allocation5], %s284
        %p286 = pneg %p106
        %p287 = pneg %p103
        %p288 = pneg %p127
        %p289 = pneg %p124
        %p290 = pneg %p148
        %p291 = pneg %p145
        %p292 = pneg %p178
        %p293 = pneg %p175
        %s294 = sand.u32 %s165, 1
        %s295 = scalar_lea.sflag [#allocation4], %s294
        %s296 = sand.u32 %s165, 1
        %s297 = scalar_lea.vmem [#allocation7], %s296
        %s298 = sadd.s32 %s30, %s31
        %p299 = scmp.lt.s32.totalorder %s298, 1
        %s300 = scalar_select %p299, %s298, 1
        %s301 = sadd.s32 %s30, %s31
        %p302 = scmp.lt.s32.totalorder %s301, 1
        %s303 = scalar_select %p302, %s301, 1
        %s304 = smul.u32 %s29, 2
        %s305 = sadd.s32 %s304, %s30
        %p306 = scmp.eq.s32.totalorder %s31, 0
        // Predicated region
        $region45: #{tpu_custom_call.1} parent=35 // pred_check
          %p307 = pneg %p306
        $region46: #{tpu_custom_call.1} parent=35 // pred_check_branch
          %309 = sbr.rel (%p307) target = $region48
        $region47: #{tpu_custom_call.1} parent=35 // pred_region
          %310 = vst [vmem:[%s297] sm:$0x1] 0.0
        $region48: #{tpu_custom_call.1} parent=35 // pred_fallthru
          _
        %v311 = vld [vmem:[%s2] sm:$0xf]
        %v312 = vld [vmem:[%s3] sm:$0xf]
        %v313 = vld [vmem:[%s260] sm:$0xf]
        %v314 = vld [vmem:[%s269] sm:$0xff]
        %316 = vset.pattern.permute.xlu0 0
        %317 = vperm.xlu0 %316, %v312
        %v318 = vpop.permute.xlu0 %317
        %vm320 = vcmask 64512
        %v322 = vsel %vm320, %v311, 0
        %324 = vmatprep.subr.mxu0 0.0
        %325 = vmatpush1.msra.mxu0 %v314
        %326 = vmatprep.subr.mxu0 0.0
        %327 = vmatpush1.msra.mxu0 0.0
        %328 = vmatprep.subr.mxu0 0.0
        %329 = vmatpush1.msra.mxu0 0.0
        %330 = vmatprep.subr.mxu0 0.0
        %331 = vmatpush1.msra.mxu0 0.0
        %332 = vmatprep.subr.mxu0 0.0
        %333 = vmatpush1.msra.mxu0 0.0
        %334 = vmatprep.subr.mxu0 0.0
        %335 = vmatpush1.msra.mxu0 0.0
        %336 = vmatprep.subr.mxu0 0.0
        %337 = vmatpush1.msra.mxu0 0.0
        %338 = vmatprep.subr.mxu0 0.0
        %339 = vmatpush1.msra.mxu0 0.0
        %340 = vmatprep.subr.mxu0 0.0
        %341 = vmatpush1.msra.mxu0 0.0
        %342 = vmatprep.subr.mxu0 0.0
        %343 = vmatpush1.msra.mxu0 0.0
        %344 = vmatprep.subr.mxu0 0.0
        %345 = vmatpush1.msra.mxu0 0.0
        %346 = vmatprep.subr.mxu0 0.0
        %347 = vmatpush1.msra.mxu0 0.0
        %348 = vmatprep.subr.mxu0 0.0
        %349 = vmatpush1.msra.mxu0 0.0
        %350 = vmatprep.subr.mxu0 0.0
        %351 = vmatpush1.msra.mxu0 0.0
        %352 = vmatprep.subr.mxu0 0.0
        %353 = vmatpush1.msra.mxu0 0.0
        %354 = vmatprep.subr.mxu0 0.0
        %355 = vmatpush1.msra.mxu0 0.0
        %356 = vmatprep.subr.mxu0 0.0
        %357 = vmatpush1.msra.mxu0 0.0
        %358 = vmatprep.subr.mxu0 0.0
        %359 = vmatpush1.msra.mxu0 0.0
        %360 = vmatprep.subr.mxu0 0.0
        %361 = vmatpush1.msra.mxu0 0.0
        %362 = vmatprep.subr.mxu0 0.0
        %363 = vmatpush1.msra.mxu0 0.0
        %364 = vmatprep.subr.mxu0 0.0
        %365 = vmatpush1.msra.mxu0 0.0
        %366 = vmatprep.subr.mxu0 0.0
        %367 = vmatpush1.msra.mxu0 0.0
        %368 = vmatprep.subr.mxu0 0.0
        %369 = vmatpush1.msra.mxu0 0.0
        %370 = vmatprep.subr.mxu0 0.0
        %371 = vmatpush1.msra.mxu0 0.0
        %372 = vmatprep.subr.mxu0 0.0
        %373 = vmatpush1.msra.mxu0 0.0
        %374 = vmatprep.subr.mxu0 0.0
        %375 = vmatpush1.msra.mxu0 0.0
        %376 = vmatprep.subr.mxu0 0.0
        %377 = vmatpush1.msra.mxu0 0.0
        %378 = vmatprep.subr.mxu0 0.0
        %379 = vmatpush1.msra.mxu0 0.0
        %380 = vmatprep.subr.mxu0 0.0
        %381 = vmatpush1.msra.mxu0 0.0
        %382 = vmatprep.subr.mxu0 0.0
        %383 = vmatpush1.msra.mxu0 0.0
        %384 = vmatprep.subr.mxu0 0.0
        %385 = vmatpush1.msra.mxu0 0.0
        %386 = vmatprep.subr.mxu0 0.0
        %387 = vmatpush1.msra.mxu0 0.0
        %388 = vmatprep.mubr.f32.mxu0 0.0
        %389 = vmatmul.mubr.f32.gmra.mrb[0].mxu0 %v322
        %v390 = vpop.f32.mrb[0].mxu0
        %v391 = vadd.f32 %v318, %v390
        %v392 = vpop.f32.mrb[0].mxu0
        %393 = vdwg.mxu0
        %v394 = vsub.f32 %v313, %v391
        %v395 = vmul.f32 %v394, %v394
        %vm396 = vcmask 1043456
        %v397 = vsel %vm396, %v395, 0.0
        %v398 = vrot.slane %v397, 4
        %v399 = vadd.f32 %v397, %v398
        %v400 = vrot.slane %v399, 2
        %v401 = vadd.f32 %v399, %v400
        %v402 = vrot.slane %v401, 1
        %v403 = vadd.f32 %v401, %v402
        %vm404 = vcmp.ge.f32.partialorder %v403, 1e-24
        %v405 = vmul.f32 %v403, 1e+24
        %v406 = vsel %vm404, 1.0, %v405
        %v407 = vld [vmem:[%s297] sm:$0x1]
        %v408 = vadd.f32 %v407, %v406
        %409 = vst [vmem:[%s297] sm:$0x1] %v408
        %s410 = sand.u32 %s165, 1
        %s411 = scalar_lea.sflag [#allocation4], %s410
        %s412 = sand.u32 %s165, 1
        %s413 = scalar_lea.vmem [#allocation7], %s412
        // Predicated region
        $region49: #{tpu_custom_call.1} parent=35 // pred_check
          %p414 = pneg %p175
        $region50: #{tpu_custom_call.1} parent=35 // pred_check_branch
          %416 = sbr.rel (%p414) target = $region52
        $region51: #{tpu_custom_call.1} parent=35 // pred_region
          %s417 = smul.u32 %s29, 2
          %s418 = sadd.s32 %s417, %s30
          %s420 = ssub.s32 16, 16
          %421 = vsyncadd %s411, %s420
          %s422 = smul.addr %s418, 16
          %s423 = scalar_lea.hbm %s4, %s422
          %s425 = sshll.u32 %s413, 4
          %s426 = int_to_ptr.vmem [resolvable:$true] %s425
          %428 = dma.vmem_to_hbm [thread:$0]  %s426, 16, %s423, %s411
        $region52: #{tpu_custom_call.1} parent=35 // pred_fallthru
          _
      $region36: #{tpu_custom_call.1} parent=5 // pred_fallthru
        _
      %p429 = scmp.le.s32.totalorder 2, %s19
      // Predicated region
      $region53: #{tpu_custom_call.1} parent=5 // pred_check
        %p430 = pneg %p429
      $region54: #{tpu_custom_call.1} parent=5 // pred_check_branch
        %432 = sbr.rel (%p430) target = $region56
      $region55: #{tpu_custom_call.1} parent=5 // pred_region
        %s433 = ssub.s32 %s19, 2
        // Predicated region
        $region57: #{tpu_custom_call.1} parent=55 // pred_check
          %p434 = pneg %p181
        $region58: #{tpu_custom_call.1} parent=55 // pred_check_branch
          %436 = sbr.rel (%p434) target = $region60
        $region59: #{tpu_custom_call.1} parent=55 // pred_region
          %s437 = sand.u32 %s166, 1
          %s438 = scalar_lea.sflag [#allocation4], %s437
          %s439 = sand.u32 %s166, 1
          %s440 = scalar_lea.vmem [#allocation7], %s439
          %441 = dma.done %s438, 16
        $region60: #{tpu_custom_call.1} parent=55 // pred_fallthru
          _
      $region56: #{tpu_custom_call.1} parent=5 // pred_fallthru
        _
    $region6: #{tpu_custom_call.1} parent=1 // loop_footer
      %s23 = sadd.s32 1, %s19
    $region7: #{tpu_custom_call.1} parent=1 // loop_footer_branch
      %18 = sbr.rel target = $region3
    $region8: #{tpu_custom_call.1} parent=1 // loop_exit
      _
    %442 = vsyncpa [#allocation3], 1
    %s443 = scalar_lea.sflag [#allocation3], 1
    %444 = vsyncpa %s443, 1
    %445 = vsyncpa [#allocation6], 1
    %s446 = scalar_lea.sflag [#allocation6], 1
    %447 = vsyncpa %s446, 1
    %448 = vsyncpa [#allocation4], 1
    %s449 = scalar_lea.sflag [#allocation4], 1
    %450 = vsyncpa %s449, 1

</llo_original>
